<compile_context>
chip_gen: v7x
topology: tpu7x:2x2x1
jax: 0.10.0
libtpu: 0.0.40
codegen_flags: <defaults>
</compile_context>

<pallas_src>
import jax
import jax.numpy as jnp
from jax.experimental import pallas as pl
from jax.experimental.pallas import tpu as pltpu


def _round_up(x, m):
    return ((x + m - 1) // m) * m


def _pick_vmem_limit_bytes():
    """Generation-aware VMEM budget: ~3/4 of physical capacity.
    128 MiB (v5e/v6e) -> ~96 MiB; 64 MiB/TC (v7x) -> ~48 MiB."""
    try:
        cap = getattr(pltpu.get_tpu_info(), "vmem_capacity_bytes", None)
        if cap:
            return (int(cap) * 3) // 4
    except Exception:
        pass
    return 48 * 1024 * 1024  # safe on every generation (under v7x's 64 MiB/TC)


def mlp_nc_kernel(x_ref, w1_ref, b1_ref, w2_ref, b2_ref, w3_ref, b3_ref, o_ref):
    # One batch tile per grid step; all weights/biases are VMEM-resident.
    # Element-wise math (log10, bias add, ReLU) stays f32 (v5e VPU/EUP have no bf16);
    # MXU operands follow the weight dtype (bf16 by default: full-rate on all gens).
    x = jnp.log10(x_ref[...].astype(jnp.float32))

    # Layer 1: Linear(in, h0) + ReLU
    h = jnp.dot(x.astype(w1_ref.dtype), w1_ref[...],
                preferred_element_type=jnp.float32) + b1_ref[...]
    h = jnp.maximum(h, 0.0)

    # Layer 2: Linear(h0, h1) + ReLU  (+ Dropout: identity in inference)
    # TODO(synk): nn.Dropout(p) training-mode masking not implemented (eval-mode identity).
    h = jnp.dot(h.astype(w2_ref.dtype), w2_ref[...],
                preferred_element_type=jnp.float32) + b2_ref[...]
    h = jnp.maximum(h, 0.0)

    # Output layer: Linear(h1, out_size) + ReLU (activs[-1] == 'relu').
    y = jnp.dot(h.astype(w3_ref.dtype), w3_ref[...],
                preferred_element_type=jnp.float32) + b3_ref[...]
    o_ref[...] = jnp.maximum(y, 0.0).astype(o_ref.dtype)


def basic_mlp_nc_forward(x, params, *, tile_b=1024, mxu_dtype=jnp.bfloat16):
    """x: [B, in_size] float32 (positive). params: dict of transposed weights/biases.

    tile_b:    max batch tile per grid step (512-1024 recommended: mem-bound kernel).
    mxu_dtype: dtype of the matmul operands (weights + activation casts). bf16 is
               full MXU rate on v5e/v6e/v7x; biases and element-wise math stay f32.
    """
    w1, b1 = params["w1"], params["b1"]
    w2, b2 = params["w2"], params["b2"]
    w3, b3 = params["w3"], params["b3"]

    B, in_size = x.shape
    h0 = w1.shape[1]
    h1 = w2.shape[1]
    out_size = w3.shape[1]

    # --- MXU operand dtype (weights). x stays f32 on the read path on purpose:
    #     log10 over many orders of magnitude is more bf16-sensitive than the weights.
    w1c = w1.astype(mxu_dtype)
    w2c = w2.astype(mxu_dtype)
    w3c = w3.astype(mxu_dtype)
    b1f = b1.astype(jnp.float32)
    b2f = b2.astype(jnp.float32)
    b3f = b3.astype(jnp.float32)

    # --- Batch tiling. No jnp.pad of x (that would materialize a second HBM copy):
    #     Pallas handles the ragged last block. Out-of-range rows of the final tile
    #     hold unspecified data (log10 may yield NaN there); each row is independent
    #     and those rows are never written back, so this is benign by construction.
    if B <= tile_b:
        # >= 2 grid steps when possible so the "parallel" batch axis can shard
        # across v7x's two TensorCores (no-op on single-TC v5e/v6e).
        tb = _round_up((B + 1) // 2, 8) if B > 8 else 8
    else:
        tb = _round_up(tile_b, 8)

    # --- VMEM budget check for the all-weights-resident strategy.
    vmem_limit = _pick_vmem_limit_bytes()
    resident_bytes = ((w1c.size + w2c.size + w3c.size) * w1c.dtype.itemsize
                      + (b1f.size + b2f.size + b3f.size) * 4)

    def _tile_bytes(t):
        io = 2 * (t * in_size * 4 + t * out_size * 4)   # double-buffered x / out tiles
        act = 2 * t * (h0 + h1) * 4                     # f32 intermediates headroom
        return io + act

    budget = int(0.6 * vmem_limit)
    while tb > 8 and resident_bytes + _tile_bytes(tb) > budget:
        tb = max(8, _round_up(tb // 2, 8))
    # TODO(synk): if resident_bytes alone exceeds the budget (very large hidden sizes),
    # tile the contraction dimension per layer with pltpu.emit_pipeline instead of
    # keeping every weight resident.

    grid = (pl.cdiv(B, tb),)

    def resident(arr):  # same block every grid step -> stays VMEM-resident
        return pl.BlockSpec(arr.shape, lambda i: (0, 0))

    # (pipeline_mode=pl.Buffered(3) on x_spec/out_spec is a lower-priority knob if a
    #  profile ever shows exposed DMA issue latency at depth 2.)
    x_spec = pl.BlockSpec((tb, in_size), lambda i: (i, 0))
    out_spec = pl.BlockSpec((tb, out_size), lambda i: (i, 0))

    flops = 2 * B * (in_size * h0 + h0 * h1 + h1 * out_size)
    bytes_accessed = (B * in_size * x.dtype.itemsize
                      + resident_bytes
                      + B * out_size * 4)
    cost = pl.CostEstimate(flops=flops,
                           transcendentals=B * in_size,  # log10
                           bytes_accessed=bytes_accessed)

    return pl.pallas_call(
        mlp_nc_kernel,
        out_shape=jax.ShapeDtypeStruct((B, out_size), jnp.float32),
        grid=grid,
        in_specs=[x_spec,
                  resident(w1c), resident(b1f),
                  resident(w2c), resident(b2f),
                  resident(w3c), resident(b3f)],
        out_specs=out_spec,
        compiler_params=pltpu.CompilerParams(
            dimension_semantics=("parallel",),   # megacore sharding on v7x
            vmem_limit_bytes=vmem_limit,
        ),
        cost_estimate=cost,
    )(x, w1c, b1f, w2c, b2f, w3c, b3f)


def init_params(key, in_size, h_sizes, out_size):
    """Deterministic parameter init (uniform, like PyTorch's default fan_in bound)."""
    dims = [in_size] + list(h_sizes) + [out_size]
    keys = jax.random.split(key, 2 * (len(dims) - 1))
    params = {}
    for i in range(len(dims) - 1):
        fan_in, fan_out = dims[i], dims[i + 1]
        bound = 1.0 / jnp.sqrt(fan_in)
        w = jax.random.uniform(keys[2 * i], (fan_in, fan_out),
                               minval=-bound, maxval=bound, dtype=jnp.float32)
        b = jax.random.uniform(keys[2 * i + 1], (1, fan_out),
                               minval=-bound, maxval=bound, dtype=jnp.float32)
        params[f"w{i + 1}"] = w
        params[f"b{i + 1}"] = b
    return params


def reference_forward(x, params):
    h = jnp.log10(x)
    h = jnp.maximum(h @ params["w1"] + params["b1"], 0.0)
    h = jnp.maximum(h @ params["w2"] + params["b2"], 0.0)
    return jnp.maximum(h @ params["w3"] + params["b3"], 0.0)


if __name__ == "__main__":
    # Small shapes consistent with the module: len(h_sizes) must be >= 2
    # (the __init__ reuses loop variable k for the final Linear).
    in_size, h_sizes, out_size = 16, (32, 64), 8

    key = jax.random.PRNGKey(0)
    kx, kp, kx2 = jax.random.split(key, 3)
    params = init_params(kp, in_size, h_sizes, out_size)

    # --- Small-batch test, default bf16 MXU operands (looser tolerance vs f32 ref).
    batch = 8
    # log10 requires positive inputs
    x = jax.random.uniform(kx, (batch, in_size), minval=0.1, maxval=10.0,
                           dtype=jnp.float32)
    out = jax.block_until_ready(basic_mlp_nc_forward(x, params))
    ref = reference_forward(x, params)
    assert out.shape == (batch, out_size)
    assert jnp.allclose(out, ref, atol=5e-2, rtol=5e-2)

    # --- Small-batch test, f32 MXU path (tight tolerance).
    out_f32 = jax.block_until_ready(
        basic_mlp_nc_forward(x, params, mxu_dtype=jnp.float32))
    assert jnp.allclose(out_f32, ref, atol=1e-5, rtol=1e-5)

    # --- Multi-tile grid test (ragged last block, resident weights across steps), f32.
    batch2 = 300
    x2 = jax.random.uniform(kx2, (batch2, in_size), minval=0.1, maxval=10.0,
                            dtype=jnp.float32)
    out2 = jax.block_until_ready(
        basic_mlp_nc_forward(x2, params, tile_b=128, mxu_dtype=jnp.float32))
    ref2 = reference_forward(x2, params)
    assert out2.shape == (batch2, out_size)
    assert jnp.allclose(out2, ref2, atol=1e-5, rtol=1e-5)

    # --- Default config on the larger batch (>=2 grid steps, bf16 MXU operands).
    out3 = jax.block_until_ready(basic_mlp_nc_forward(x2, params))
    assert out3.shape == (batch2, out_size)
    assert jnp.allclose(out3, ref2, atol=5e-2, rtol=5e-2)

    print("KERNEL_OK")
</pallas_src>

<mosaic_0001>
module attributes {stable_mosaic.version = 11 : i64} {
  func.func @mlp_nc_kernel(%arg0: i32, %arg1: memref<8x16xf32, #tpu.memory_space<vmem>>, %arg2: memref<16x32xbf16, #tpu.memory_space<vmem>>, %arg3: memref<1x32xf32, #tpu.memory_space<vmem>>, %arg4: memref<32x64xbf16, #tpu.memory_space<vmem>>, %arg5: memref<1x64xf32, #tpu.memory_space<vmem>>, %arg6: memref<64x8xbf16, #tpu.memory_space<vmem>>, %arg7: memref<1x8xf32, #tpu.memory_space<vmem>>, %arg8: memref<8x8xf32, #tpu.memory_space<vmem>>) attributes {dimension_semantics = [#tpu.dimension_semantics<parallel>], iteration_bounds = array<i64: 1>, scalar_prefetch = 0 : i64, scratch_operands = 0 : i64, tpu.core_type = #tpu.core_type<tc>, window_params = [{transform_indices = @transform_0, window_bounds = array<i64: 8, 16>}, {pipeline_mode = #tpu.pipeline_mode<synchronous>, transform_indices = @transform_1, window_bounds = array<i64: 16, 32>}, {pipeline_mode = #tpu.pipeline_mode<synchronous>, transform_indices = @transform_2, window_bounds = array<i64: 1, 32>}, {pipeline_mode = #tpu.pipeline_mode<synchronous>, transform_indices = @transform_3, window_bounds = array<i64: 32, 64>}, {pipeline_mode = #tpu.pipeline_mode<synchronous>, transform_indices = @transform_4, window_bounds = array<i64: 1, 64>}, {pipeline_mode = #tpu.pipeline_mode<synchronous>, transform_indices = @transform_5, window_bounds = array<i64: 64, 8>}, {pipeline_mode = #tpu.pipeline_mode<synchronous>, transform_indices = @transform_6, window_bounds = array<i64: 1, 8>}, {transform_indices = @transform_7, window_bounds = array<i64: 8, 8>}]} {
    %c0 = arith.constant 0 : index
    %c0_0 = arith.constant 0 : index
    %0 = vector.load %arg1[%c0, %c0_0] : memref<8x16xf32, #tpu.memory_space<vmem>>, vector<8x16xf32>
    %1 = math.log %0 : vector<8x16xf32>
    %cst = arith.constant 0.434294492 : f32
    %2 = vector.broadcast %cst : f32 to vector<8x16xf32>
    %3 = arith.mulf %1, %2 : vector<8x16xf32>
    %4 = arith.truncf %3 : vector<8x16xf32> to vector<8x16xbf16>
    %c0_1 = arith.constant 0 : index
    %c0_2 = arith.constant 0 : index
    %5 = vector.load %arg2[%c0_1, %c0_2] : memref<16x32xbf16, #tpu.memory_space<vmem>>, vector<16x32xbf16>
    %cst_3 = arith.constant dense<0.000000e+00> : vector<8x32xf32>
    %6 = tpu.matmul %4, %5, %cst_3 {dimension_numbers = #tpu.dot_dimension_numbers<[1], [0], [0], [1], [0, 0, 1, 1], [], []>} : vector<8x16xbf16>, vector<16x32xbf16>, vector<8x32xf32> -> vector<8x32xf32>
    %c0_4 = arith.constant 0 : index
    %c0_5 = arith.constant 0 : index
    %7 = vector.load %arg3[%c0_4, %c0_5] : memref<1x32xf32, #tpu.memory_space<vmem>>, vector<1x32xf32>
    %8 = vector.broadcast %7 : vector<1x32xf32> to vector<8x32xf32>
    %9 = arith.addf %6, %8 : vector<8x32xf32>
    %cst_6 = arith.constant 0.000000e+00 : f32
    %10 = vector.broadcast %cst_6 : f32 to vector<8x32xf32>
    %11 = arith.maximumf %9, %10 : vector<8x32xf32>
    %12 = arith.truncf %11 : vector<8x32xf32> to vector<8x32xbf16>
    %c0_7 = arith.constant 0 : index
    %c0_8 = arith.constant 0 : index
    %13 = vector.load %arg4[%c0_7, %c0_8] : memref<32x64xbf16, #tpu.memory_space<vmem>>, vector<32x64xbf16>
    %cst_9 = arith.constant dense<0.000000e+00> : vector<8x64xf32>
    %14 = tpu.matmul %12, %13, %cst_9 {dimension_numbers = #tpu.dot_dimension_numbers<[1], [0], [0], [1], [0, 0, 1, 1], [], []>} : vector<8x32xbf16>, vector<32x64xbf16>, vector<8x64xf32> -> vector<8x64xf32>
    %c0_10 = arith.constant 0 : index
    %c0_11 = arith.constant 0 : index
    %15 = vector.load %arg5[%c0_10, %c0_11] : memref<1x64xf32, #tpu.memory_space<vmem>>, vector<1x64xf32>
    %16 = vector.broadcast %15 : vector<1x64xf32> to vector<8x64xf32>
    %17 = arith.addf %14, %16 : vector<8x64xf32>
    %cst_12 = arith.constant 0.000000e+00 : f32
    %18 = vector.broadcast %cst_12 : f32 to vector<8x64xf32>
    %19 = arith.maximumf %17, %18 : vector<8x64xf32>
    %20 = arith.truncf %19 : vector<8x64xf32> to vector<8x64xbf16>
    %c0_13 = arith.constant 0 : index
    %c0_14 = arith.constant 0 : index
    %21 = vector.load %arg6[%c0_13, %c0_14] : memref<64x8xbf16, #tpu.memory_space<vmem>>, vector<64x8xbf16>
    %cst_15 = arith.constant dense<0.000000e+00> : vector<8x8xf32>
    %22 = tpu.matmul %20, %21, %cst_15 {dimension_numbers = #tpu.dot_dimension_numbers<[1], [0], [0], [1], [0, 0, 1, 1], [], []>} : vector<8x64xbf16>, vector<64x8xbf16>, vector<8x8xf32> -> vector<8x8xf32>
    %c0_16 = arith.constant 0 : index
    %c0_17 = arith.constant 0 : index
    %23 = vector.load %arg7[%c0_16, %c0_17] : memref<1x8xf32, #tpu.memory_space<vmem>>, vector<1x8xf32>
    %24 = vector.broadcast %23 : vector<1x8xf32> to vector<8x8xf32>
    %25 = arith.addf %22, %24 : vector<8x8xf32>
    %cst_18 = arith.constant 0.000000e+00 : f32
    %26 = vector.broadcast %cst_18 : f32 to vector<8x8xf32>
    %27 = arith.maximumf %25, %26 : vector<8x8xf32>
    %c0_19 = arith.constant 0 : index
    %c0_20 = arith.constant 0 : index
    %28 = vector.load %arg8[%c0_19, %c0_20] : memref<8x8xf32, #tpu.memory_space<vmem>>, vector<8x8xf32>
    tpu.vector_store %arg8[%c0_19, %c0_20], %27 {strides = array<i32>} : memref<8x8xf32, #tpu.memory_space<vmem>>, vector<8x8xf32>,
    return
  }
  func.func @transform_0(%arg0: i32) -> (i32, i32) {
    %c0_i32 = arith.constant 0 : i32
    %c0_i32_0 = arith.constant 0 : i32
    return %arg0, %c0_i32 : i32, i32
  }
  func.func @transform_1(%arg0: i32) -> (i32, i32) {
    %c0_i32 = arith.constant 0 : i32
    %c0_i32_0 = arith.constant 0 : i32
    %c0_i32_1 = arith.constant 0 : i32
    return %c0_i32, %c0_i32_0 : i32, i32
  }
  func.func @transform_2(%arg0: i32) -> (i32, i32) {
    %c0_i32 = arith.constant 0 : i32
    %c0_i32_0 = arith.constant 0 : i32
    %c0_i32_1 = arith.constant 0 : i32
    return %c0_i32, %c0_i32_0 : i32, i32
  }
  func.func @transform_3(%arg0: i32) -> (i32, i32) {
    %c0_i32 = arith.constant 0 : i32
    %c0_i32_0 = arith.constant 0 : i32
    %c0_i32_1 = arith.constant 0 : i32
    return %c0_i32, %c0_i32_0 : i32, i32
  }
  func.func @transform_4(%arg0: i32) -> (i32, i32) {
    %c0_i32 = arith.constant 0 : i32
    %c0_i32_0 = arith.constant 0 : i32
    %c0_i32_1 = arith.constant 0 : i32
    return %c0_i32, %c0_i32_0 : i32, i32
  }
  func.func @transform_5(%arg0: i32) -> (i32, i32) {
    %c0_i32 = arith.constant 0 : i32
    %c0_i32_0 = arith.constant 0 : i32
    %c0_i32_1 = arith.constant 0 : i32
    return %c0_i32, %c0_i32_0 : i32, i32
  }
  func.func @transform_6(%arg0: i32) -> (i32, i32) {
    %c0_i32 = arith.constant 0 : i32
    %c0_i32_0 = arith.constant 0 : i32
    %c0_i32_1 = arith.constant 0 : i32
    return %c0_i32, %c0_i32_0 : i32, i32
  }
  func.func @transform_7(%arg0: i32) -> (i32, i32) {
    %c0_i32 = arith.constant 0 : i32
    %c0_i32_0 = arith.constant 0 : i32
    return %arg0, %c0_i32 : i32, i32
  }
}

</mosaic_0001>

<llo_original>
// kernel: tpu_custom_call.1
$region0: #{tpu_custom_call.1}
  #allocation0 [shape = 'u32[]', space=smem, size = 0x4, offset = 0x4, fixed_abs, tag = 'smem constant byte address 0x4 - core index']
  #allocation1 [shape = 'u32[144,128]{1,0:T(1,128)}', space=vmem, size = 0x12000, scoped, tag = 'internal scratch']
  %s0 = inlined_call_operand.vmem [shape: f32[8,16], index: 0, kind: input, shape index: {}]
  %s1 = inlined_call_operand.vmem [shape: bf16[16,32], index: 1, kind: input, shape index: {}]
  %s2 = inlined_call_operand.vmem [shape: f32[1,32], index: 2, kind: input, shape index: {}]
  %s3 = inlined_call_operand.vmem [shape: bf16[32,64], index: 3, kind: input, shape index: {}]
  %s4 = inlined_call_operand.vmem [shape: f32[1,64], index: 4, kind: input, shape index: {}]
  %s5 = inlined_call_operand.vmem [shape: bf16[64,8], index: 5, kind: input, shape index: {}]
  %s6 = inlined_call_operand.vmem [shape: f32[1,8], index: 6, kind: input, shape index: {}]
  %s7 = inlined_call_operand.hbm [shape: f32[8,8], index: 7, kind: output, shape index: {}]
  %s8 = sld [smem:[#allocation0]]
  $region38: #{tpu_custom_call.1} parent=0
    _
  %s10 = ssub.s32 1, %s8
  %s11 = scalar_select 0, %s10, %s8
  $region1: #{tpu_custom_call.1} parent=0
    #allocation2 [shape = 'u8[4096]{0}', space=vmem, size = 0x1000, scoped, tag = 'output window, operand 0, single buffered']
    #allocation3 [shape = 's32[1]{0}', space=sflag, size = 0x4, scoped, tag = 'scoped memory for tpu_custom_call.1']
    %12 = vsyncpa [#allocation3], 0
    // Predicated region
    $region2: #{tpu_custom_call.1} parent=1 // pred_check
      _
    $region3: #{tpu_custom_call.1} parent=1 // pred_check_branch
      %14 = sbr.rel (0) target = $region5
    $region4: #{tpu_custom_call.1} parent=1 // pred_region
      _
    $region5: #{tpu_custom_call.1} parent=1 // pred_fallthru
      _
    // Predicated region
    $region6: #{tpu_custom_call.1} parent=1 // pred_check
      _
    $region7: #{tpu_custom_call.1} parent=1 // pred_check_branch
      %16 = sbr.rel (0) target = $region9
    $region8: #{tpu_custom_call.1} parent=1 // pred_region
      _
    $region9: #{tpu_custom_call.1} parent=1 // pred_fallthru
      _
    // Predicated region
    $region10: #{tpu_custom_call.1} parent=1 // pred_check
      _
    $region11: #{tpu_custom_call.1} parent=1 // pred_check_branch
      %18 = sbr.rel (0) target = $region13
    $region12: #{tpu_custom_call.1} parent=1 // pred_region
      _
    $region13: #{tpu_custom_call.1} parent=1 // pred_fallthru
      _
    // Predicated region
    $region14: #{tpu_custom_call.1} parent=1 // pred_check
      _
    $region15: #{tpu_custom_call.1} parent=1 // pred_check_branch
      %20 = sbr.rel (0) target = $region17
    $region16: #{tpu_custom_call.1} parent=1 // pred_region
      _
    $region17: #{tpu_custom_call.1} parent=1 // pred_fallthru
      _
    // Predicated region
    $region18: #{tpu_custom_call.1} parent=1 // pred_check
      _
    $region19: #{tpu_custom_call.1} parent=1 // pred_check_branch
      %22 = sbr.rel (0) target = $region21
    $region20: #{tpu_custom_call.1} parent=1 // pred_region
      _
    $region21: #{tpu_custom_call.1} parent=1 // pred_fallthru
      _
    // Predicated region
    $region22: #{tpu_custom_call.1} parent=1 // pred_check
      _
    $region23: #{tpu_custom_call.1} parent=1 // pred_check_branch
      %24 = sbr.rel (0) target = $region25
    $region24: #{tpu_custom_call.1} parent=1 // pred_region
      _
    $region25: #{tpu_custom_call.1} parent=1 // pred_fallthru
      _
    // Predicated region
    $region26: #{tpu_custom_call.1} parent=1 // pred_check
      _
    $region27: #{tpu_custom_call.1} parent=1 // pred_check_branch
      %26 = sbr.rel (0) target = $region29
    $region28: #{tpu_custom_call.1} parent=1 // pred_region
      _
    $region29: #{tpu_custom_call.1} parent=1 // pred_fallthru
      _
    %v28 = vld [vmem:[%s0] sm:$0xff]
    %v29 = vlog2.pop %v28
    %v30 = vmul.f32 %v29, 0.6931472
    %v31 = vmul.f32 %v30, 0.4342945
    %v32 = vpack.c.bf16 %v31, %v31
    %v33 = vld [vmem:[%s1] sm:$0xf]
    %v34 = vld [vmem:[%s1 + $0x4] sm:$0xf]
    %v35 = vld [vmem:[%s2] sm:$0x1]
    %v37 = vlaneseq
    %v38 = vshrl.u32 %v37, 7
    %v39 = vsub.s32 0, %v38
    %v40 = vrot.slane %v35, %v39
    %v44 = vunpack.c.l.b16 %v33
    %v45 = vunpack.c.l.b16 %v34
    %v46 = vpack.c.b16 %v45, %v44
    %vm48 = vcmask 130048
    %v50 = vsel %vm48, %v32, 0
    %52 = vmatprep.subr.bf16.mxu0 0
    %53 = vmatpush1.bf16.msra.mxu0 %v46
    %54 = vmatprep.subr.bf16.mxu0 0
    %55 = vmatpush1.bf16.msra.mxu0 0
    %56 = vmatprep.subr.bf16.mxu0 0
    %57 = vmatpush1.bf16.msra.mxu0 0
    %58 = vmatprep.subr.bf16.mxu0 0
    %59 = vmatpush1.bf16.msra.mxu0 0
    %60 = vmatprep.subr.bf16.mxu0 0
    %61 = vmatpush1.bf16.msra.mxu0 0
    %62 = vmatprep.subr.bf16.mxu0 0
    %63 = vmatpush1.bf16.msra.mxu0 0
    %64 = vmatprep.subr.bf16.mxu0 0
    %65 = vmatpush1.bf16.msra.mxu0 0
    %66 = vmatprep.subr.bf16.mxu0 0
    %67 = vmatpush1.bf16.msra.mxu0 0
    %68 = vmatprep.subr.bf16.mxu0 0
    %69 = vmatpush1.bf16.msra.mxu0 0
    %70 = vmatprep.subr.bf16.mxu0 0
    %71 = vmatpush1.bf16.msra.mxu0 0
    %72 = vmatprep.subr.bf16.mxu0 0
    %73 = vmatpush1.bf16.msra.mxu0 0
    %74 = vmatprep.subr.bf16.mxu0 0
    %75 = vmatpush1.bf16.msra.mxu0 0
    %76 = vmatprep.subr.bf16.mxu0 0
    %77 = vmatpush1.bf16.msra.mxu0 0
    %78 = vmatprep.subr.bf16.mxu0 0
    %79 = vmatpush1.bf16.msra.mxu0 0
    %80 = vmatprep.subr.bf16.mxu0 0
    %81 = vmatpush1.bf16.msra.mxu0 0
    %82 = vmatprep.subr.bf16.mxu0 0
    %83 = vmatpush1.bf16.msra.mxu0 0
    %84 = vmatprep.mubr.bf16.mxu0 0
    %85 = vmatmul.mubr.bf16.gmra.mrb[0].mxu0 %v50
    %v86 = vpop.f32.mrb[0].mxu0
    %v87 = vadd.f32 %v40, %v86
    %v88 = vpop.f32.mrb[0].mxu0
    %v89 = vpop.f32.mrb[0].mxu0
    %v90 = vpop.f32.mrb[0].mxu0
    %91 = vdwg.mxu0
    %v92 = vmax.f32 %v87, 0.0
    %v93 = vpack.c.bf16 %v92, %v92
    %v94 = vld [vmem:[%s3] sm:$0xf]
    %v95 = vld [vmem:[%s3 + $0x4] sm:$0xf]
    %v96 = vld [vmem:[%s3 + $0x8] sm:$0xf]
    %v97 = vld [vmem:[%s3 + $0xc] sm:$0xf]
    %v98 = vld [vmem:[%s4] sm:$0x1]
    %v100 = vlaneseq
    %v101 = vshrl.u32 %v100, 7
    %v102 = vsub.s32 0, %v101
    %v103 = vrot.slane %v98, %v102
    %v109 = vunpack.c.l.b16 %v94
    %v110 = vunpack.c.l.b16 %v95
    %v111 = vunpack.c.l.b16 %v96
    %v112 = vunpack.c.l.b16 %v97
    %v113 = vpack.c.b16 %v110, %v109
    %v114 = vpack.c.b16 %v112, %v111
    %vm117 = vcmask 261120
    %v119 = vsel %vm117, %v93, 0
    %121 = vmatprep.subr.bf16.mxu0 0
    %122 = vmatpush1.bf16.msra.mxu0 %v113
    %123 = vmatprep.subr.bf16.mxu0 0
    %124 = vmatpush1.bf16.msra.mxu0 %v114
    %125 = vmatprep.subr.bf16.mxu0 0
    %126 = vmatpush1.bf16.msra.mxu0 0
    %127 = vmatprep.subr.bf16.mxu0 0
    %128 = vmatpush1.bf16.msra.mxu0 0
    %129 = vmatprep.subr.bf16.mxu0 0
    %130 = vmatpush1.bf16.msra.mxu0 0
    %131 = vmatprep.subr.bf16.mxu0 0
    %132 = vmatpush1.bf16.msra.mxu0 0
    %133 = vmatprep.subr.bf16.mxu0 0
    %134 = vmatpush1.bf16.msra.mxu0 0
    %135 = vmatprep.subr.bf16.mxu0 0
    %136 = vmatpush1.bf16.msra.mxu0 0
    %137 = vmatprep.subr.bf16.mxu0 0
    %138 = vmatpush1.bf16.msra.mxu0 0
    %139 = vmatprep.subr.bf16.mxu0 0
    %140 = vmatpush1.bf16.msra.mxu0 0
    %141 = vmatprep.subr.bf16.mxu0 0
    %142 = vmatpush1.bf16.msra.mxu0 0
    %143 = vmatprep.subr.bf16.mxu0 0
    %144 = vmatpush1.bf16.msra.mxu0 0
    %145 = vmatprep.subr.bf16.mxu0 0
    %146 = vmatpush1.bf16.msra.mxu0 0
    %147 = vmatprep.subr.bf16.mxu0 0
    %148 = vmatpush1.bf16.msra.mxu0 0
    %149 = vmatprep.subr.bf16.mxu0 0
    %150 = vmatpush1.bf16.msra.mxu0 0
    %151 = vmatprep.subr.bf16.mxu0 0
    %152 = vmatpush1.bf16.msra.mxu0 0
    %153 = vmatprep.mubr.bf16.mxu0 0
    %154 = vmatmul.mubr.bf16.gmra.mrb[0].mxu0 %v119
    %v155 = vpop.f32.mrb[0].mxu0
    %v156 = vadd.f32 %v103, %v155
    %v157 = vpop.f32.mrb[0].mxu0
    %v158 = vpop.f32.mrb[0].mxu0
    %v159 = vpop.f32.mrb[0].mxu0
    %160 = vdwg.mxu0
    %v161 = vmax.f32 %v156, 0.0
    %v162 = vpack.c.bf16 %v161, %v161
    %v163 = vld [vmem:[%s5] sm:$0xf]
    %v164 = vld [vmem:[%s5 + $0x4] sm:$0xf]
    %v165 = vld [vmem:[%s5 + $0x8] sm:$0xf]
    %v166 = vld [vmem:[%s5 + $0xc] sm:$0xf]
    %v167 = vld [vmem:[%s5 + $0x10] sm:$0xf]
    %v168 = vld [vmem:[%s5 + $0x14] sm:$0xf]
    %v169 = vld [vmem:[%s5 + $0x18] sm:$0xf]
    %v170 = vld [vmem:[%s5 + $0x1c] sm:$0xf]
    %v171 = vld [vmem:[%s6] sm:$0x1]
    %v173 = vlaneseq
    %v174 = vshrl.u32 %v173, 7
    %v175 = vsub.s32 0, %v174
    %v176 = vrot.slane %v171, %v175
    %v186 = vunpack.c.l.b16 %v163
    %v187 = vunpack.c.l.b16 %v164
    %v188 = vunpack.c.l.b16 %v165
    %v189 = vunpack.c.l.b16 %v166
    %v190 = vunpack.c.l.b16 %v167
    %v191 = vunpack.c.l.b16 %v168
    %v192 = vunpack.c.l.b16 %v169
    %v193 = vunpack.c.l.b16 %v170
    %v194 = vpack.c.b16 %v187, %v186
    %v195 = vpack.c.b16 %v189, %v188
    %v196 = vpack.c.b16 %v191, %v190
    %v197 = vpack.c.b16 %v193, %v192
    %vm202 = vcmask 523264
    %v204 = vsel %vm202, %v162, 0
    %206 = vmatprep.subr.bf16.mxu0 0
    %207 = vmatpush1.bf16.msra.mxu0 %v194
    %208 = vmatprep.subr.bf16.mxu0 0
    %209 = vmatpush1.bf16.msra.mxu0 %v195
    %210 = vmatprep.subr.bf16.mxu0 0
    %211 = vmatpush1.bf16.msra.mxu0 %v196
    %212 = vmatprep.subr.bf16.mxu0 0
    %213 = vmatpush1.bf16.msra.mxu0 %v197
    %214 = vmatprep.subr.bf16.mxu0 0
    %215 = vmatpush1.bf16.msra.mxu0 0
    %216 = vmatprep.subr.bf16.mxu0 0
    %217 = vmatpush1.bf16.msra.mxu0 0
    %218 = vmatprep.subr.bf16.mxu0 0
    %219 = vmatpush1.bf16.msra.mxu0 0
    %220 = vmatprep.subr.bf16.mxu0 0
    %221 = vmatpush1.bf16.msra.mxu0 0
    %222 = vmatprep.subr.bf16.mxu0 0
    %223 = vmatpush1.bf16.msra.mxu0 0
    %224 = vmatprep.subr.bf16.mxu0 0
    %225 = vmatpush1.bf16.msra.mxu0 0
    %226 = vmatprep.subr.bf16.mxu0 0
    %227 = vmatpush1.bf16.msra.mxu0 0
    %228 = vmatprep.subr.bf16.mxu0 0
    %229 = vmatpush1.bf16.msra.mxu0 0
    %230 = vmatprep.subr.bf16.mxu0 0
    %231 = vmatpush1.bf16.msra.mxu0 0
    %232 = vmatprep.subr.bf16.mxu0 0
    %233 = vmatpush1.bf16.msra.mxu0 0
    %234 = vmatprep.subr.bf16.mxu0 0
    %235 = vmatpush1.bf16.msra.mxu0 0
    %236 = vmatprep.subr.bf16.mxu0 0
    %237 = vmatpush1.bf16.msra.mxu0 0
    %238 = vmatprep.mubr.bf16.mxu0 0
    %239 = vmatmul.mubr.bf16.gmra.mrb[0].mxu0 %v204
    %v240 = vpop.f32.mrb[0].mxu0
    %v241 = vadd.f32 %v176, %v240
    %v242 = vpop.f32.mrb[0].mxu0
    %v243 = vpop.f32.mrb[0].mxu0
    %v244 = vpop.f32.mrb[0].mxu0
    %245 = vdwg.mxu0
    %v246 = vmax.f32 %v241, 0.0
    %vm247 = vcmask 64512
    %248 = vst.msk [vmem:[#allocation2] sm:$0xff] %vm247, %v246
    // Predicated region
    $region30: #{tpu_custom_call.1} parent=1 // pred_check
      _
    $region31: #{tpu_custom_call.1} parent=1 // pred_check_branch
      %250 = sbr.rel (0) target = $region33
    $region32: #{tpu_custom_call.1} parent=1 // pred_region
      %s252 = ssub.s32 128, 128
      %253 = vsyncadd [#allocation3], %s252
      %s255 = sshll.u32 [#allocation2], 4
      %s256 = int_to_ptr.vmem [resolvable:$true] %s255
      %258 = dma.vmem_to_hbm [thread:$0]  %s256, 128, %s7, [#allocation3]
    $region33: #{tpu_custom_call.1} parent=1 // pred_fallthru
      _
    // Predicated region
    $region34: #{tpu_custom_call.1} parent=1 // pred_check
      _
    $region35: #{tpu_custom_call.1} parent=1 // pred_check_branch
      %260 = sbr.rel (0) target = $region37
    $region36: #{tpu_custom_call.1} parent=1 // pred_region
      %261 = dma.done [#allocation3], 128
    $region37: #{tpu_custom_call.1} parent=1 // pred_fallthru
      _
    %262 = vsyncpa [#allocation3], 1

</llo_original>
